<compile_context>
chip_gen: v7x
topology: tpu7x:2x2x1
jax: 0.10.0
libtpu: 0.0.40
codegen_flags: <defaults>
</compile_context>

<pallas_src>
import math

import jax
import jax.numpy as jnp
from jax.experimental import pallas as pl
from jax.experimental.pallas import tpu as pltpu


def _round_up(v, m):
    return (v + m - 1) // m * m


def sage_conv_kernel(x_i_ref, x_k_ref, a_ref, w1t_ref, w2t_ref, b1_ref, b2_ref,
                     o_ref, acc_ref):
    k = pl.program_id(1)

    @pl.when(k == 0)
    def _():
        acc_ref[...] = jnp.zeros_like(acc_ref)

    # Per-source messages for this contraction tile: h2 = x_k @ W2^T + b2.
    # b2 is folded here so zero-in-degree rows never receive it
    # (rowsum(A_hat) == 0 for those rows).
    h2 = jnp.dot(x_k_ref[...], w2t_ref[...], preferred_element_type=jnp.float32)
    h2 = h2 + b2_ref[...]

    # Mean aggregation as a dense matmul on the MXU: acc += A_hat[i, k] @ h2.
    acc_ref[...] += jnp.dot(a_ref[...], h2.astype(a_ref.dtype),
                            preferred_element_type=jnp.float32)

    @pl.when(k == pl.num_programs(1) - 1)
    def _():
        # Self term + output bias only in the finalize step
        # (avoids per-k rebroadcast of the bias and recompute of wh_1).
        wh1 = jnp.dot(x_i_ref[...], w1t_ref[...],
                      preferred_element_type=jnp.float32)
        o_ref[...] = (acc_ref[...] + wh1 + b1_ref[...]).astype(o_ref.dtype)


def sage_conv_forward(x, edge_index, w1, b1, w2, b2, *, tile_n=128, tile_k=128):
    """x: [N, C_in] f32, edge_index: [2, E] int32, w*: [C_out, C_in], b*: [C_out].

    For real graph sizes bump tile_n/tile_k (e.g. 256/512 on v6e, 256/256 on
    v7x's 64 MiB VMEM) -- tiles here are 128 so the toy demo still exercises a
    multi-step grid.
    """
    n, c_in = x.shape
    c_out = w1.shape[0]
    e = edge_index.shape[1]
    src = edge_index[0]
    dst = edge_index[1]

    # ---- glue (XLA, O(E) + O(N^2)): dense row-normalized adjacency, bf16 ----
    # TODO(synk): for large graphs, build A_hat tiles inside the kernel from
    # scalar-prefetched (src, dst, deg) instead of materializing [N, N] in HBM.
    ones_e = jnp.ones((e,), jnp.float32)
    deg = jax.ops.segment_sum(ones_e, dst, num_segments=n)
    counts = jax.ops.segment_sum(ones_e, dst * n + src, num_segments=n * n)
    a_hat = counts.reshape(n, n) / jnp.maximum(deg, 1.0)[:, None]

    # ---- pad to tile-aligned, lane-dense shapes; bf16 matmul operands ----
    n_pad = _round_up(n, max(tile_n, tile_k))
    c_in_pad = _round_up(c_in, 128)
    c_out_pad = _round_up(c_out, 128)

    def pad2(arr, rows, cols, dtype):
        arr = arr.astype(dtype)
        return jnp.pad(arr, ((0, rows - arr.shape[0]), (0, cols - arr.shape[1])))

    x_p = pad2(x, n_pad, c_in_pad, jnp.bfloat16)
    a_p = pad2(a_hat, n_pad, n_pad, jnp.bfloat16)
    w1t_p = pad2(jnp.transpose(w1), c_in_pad, c_out_pad, jnp.bfloat16)
    w2t_p = pad2(jnp.transpose(w2), c_in_pad, c_out_pad, jnp.bfloat16)
    b1_p = pad2(b1.reshape(1, c_out), 1, c_out_pad, jnp.float32)
    b2_p = pad2(b2.reshape(1, c_out), 1, c_out_pad, jnp.float32)

    assert n_pad % tile_n == 0 and n_pad % tile_k == 0
    grid = (n_pad // tile_n, n_pad // tile_k)

    out_p = pl.pallas_call(
        sage_conv_kernel,
        out_shape=jax.ShapeDtypeStruct((n_pad, c_out_pad), jnp.float32),
        grid_spec=pltpu.PrefetchScalarGridSpec(
            num_scalar_prefetch=0,
            grid=grid,
            in_specs=[
                pl.BlockSpec((tile_n, c_in_pad), lambda i, k: (i, 0)),      # x rows (self term)
                pl.BlockSpec((tile_k, c_in_pad), lambda i, k: (k, 0)),      # x rows (messages)
                pl.BlockSpec((tile_n, tile_k), lambda i, k: (i, k)),        # A_hat tile
                pl.BlockSpec((c_in_pad, c_out_pad), lambda i, k: (0, 0)),   # W1^T
                pl.BlockSpec((c_in_pad, c_out_pad), lambda i, k: (0, 0)),   # W2^T
                pl.BlockSpec((1, c_out_pad), lambda i, k: (0, 0)),          # b1
                pl.BlockSpec((1, c_out_pad), lambda i, k: (0, 0)),          # b2
            ],
            out_specs=pl.BlockSpec((tile_n, c_out_pad), lambda i, k: (i, 0)),
            scratch_shapes=[pltpu.VMEM((tile_n, c_out_pad), jnp.float32)],
        ),
        compiler_params=pltpu.CompilerParams(
            dimension_semantics=("parallel", "arbitrary"),
            vmem_limit_bytes=48 * 1024 * 1024,
        ),
    )(x_p, x_p, a_p, w1t_p, w2t_p, b1_p, b2_p)

    return out_p[:n, :c_out]


def glorot_uniform(key, shape):
    # Matches pyg Linear 'glorot' init: U(-a, a), a = sqrt(6 / (fan_in + fan_out)).
    fan_out, fan_in = shape
    a = math.sqrt(6.0 / (fan_in + fan_out))
    return jax.random.uniform(key, shape, jnp.float32, minval=-a, maxval=a)


if __name__ == "__main__":
    key = jax.random.PRNGKey(0)
    k_x, k_src, k_dst, k_w1, k_w2, k_b1, k_b2 = jax.random.split(key, 7)

    N, E = 200, 800          # n_pad=256 -> grid (2, 2): exercises init/accumulate/finalize
    C_IN, C_OUT = 8, 32

    x = jax.random.normal(k_x, (N, C_IN), jnp.float32)
    src = jax.random.randint(k_src, (E,), 0, N, jnp.int32)
    dst = jax.random.randint(k_dst, (E,), 0, N, jnp.int32)
    # Ensure destination index N-1 appears so scatter's implied dim_size == N
    # (matches the + broadcast in the PyTorch forward).
    dst = dst.at[0].set(N - 1)
    edge_index = jnp.stack([src, dst], axis=0)

    w1 = glorot_uniform(k_w1, (C_OUT, C_IN))
    w2 = glorot_uniform(k_w2, (C_OUT, C_IN))
    # Non-zero biases to exercise b1/b2 handling (incl. zero-degree rows).
    b1 = 0.1 * jax.random.normal(k_b1, (C_OUT,), jnp.float32)
    b2 = 0.1 * jax.random.normal(k_b2, (C_OUT,), jnp.float32)

    out = sage_conv_forward(x, edge_index, w1, b1, w2, b2)
    out = jax.block_until_ready(out)
    assert out.shape == (N, C_OUT)

    # Pure-JAX f32 reference (original scatter-mean formulation).
    wh1_ref = x @ w1.T + b1
    msg_ref = x[src] @ w2.T + b2
    sums = jax.ops.segment_sum(msg_ref, dst, num_segments=N)
    cnts = jax.ops.segment_sum(jnp.ones((E,), jnp.float32), dst, num_segments=N)
    ref_f32 = wh1_ref + sums / jnp.maximum(cnts, 1.0)[:, None]

    # Reference with the same bf16 operand quantization as the kernel
    # (isolates kernel-structure correctness from the bf16 cast).
    q = lambda a: a.astype(jnp.bfloat16).astype(jnp.float32)
    deg = jax.ops.segment_sum(jnp.ones((E,), jnp.float32), dst, num_segments=N)
    counts = jax.ops.segment_sum(jnp.ones((E,), jnp.float32), dst * N + src,
                                 num_segments=N * N).reshape(N, N)
    a_hat_q = q(counts / jnp.maximum(deg, 1.0)[:, None])
    ref_q = (q(x) @ q(w1).T + b1) + a_hat_q @ q(q(x) @ q(w2).T + b2)

    err_q = float(jnp.max(jnp.abs(out - ref_q)))
    assert jnp.allclose(out, ref_q, atol=2e-2, rtol=2e-2), err_q
    err_f = float(jnp.max(jnp.abs(out - ref_f32)))
    assert jnp.allclose(out, ref_f32, atol=1.5e-1, rtol=1.5e-1), err_f

    print("KERNEL_OK")
</pallas_src>

<mosaic_0001>
module attributes {stable_mosaic.version = 11 : i64} {
  func.func @sage_conv_kernel(%arg0: i32, %arg1: i32, %arg2: memref<128x128xbf16, #tpu.memory_space<vmem>>, %arg3: memref<128x128xbf16, #tpu.memory_space<vmem>>, %arg4: memref<128x128xbf16, #tpu.memory_space<vmem>>, %arg5: memref<128x128xbf16, #tpu.memory_space<vmem>>, %arg6: memref<128x128xbf16, #tpu.memory_space<vmem>>, %arg7: memref<1x128xf32, #tpu.memory_space<vmem>>, %arg8: memref<1x128xf32, #tpu.memory_space<vmem>>, %arg9: memref<128x128xf32, #tpu.memory_space<vmem>>, %arg10: memref<128x128xf32, #tpu.memory_space<vmem>>) attributes {dimension_semantics = [#tpu.dimension_semantics<parallel>, #tpu.dimension_semantics<arbitrary>], iteration_bounds = array<i64: 2, 2>, scalar_prefetch = 0 : i64, scratch_operands = 1 : i64, tpu.core_type = #tpu.core_type<tc>, window_params = [{transform_indices = @transform_0, window_bounds = array<i64: 128, 128>}, {transform_indices = @transform_1, window_bounds = array<i64: 128, 128>}, {transform_indices = @transform_2, window_bounds = array<i64: 128, 128>}, {pipeline_mode = #tpu.pipeline_mode<synchronous>, transform_indices = @transform_3, window_bounds = array<i64: 128, 128>}, {pipeline_mode = #tpu.pipeline_mode<synchronous>, transform_indices = @transform_4, window_bounds = array<i64: 128, 128>}, {pipeline_mode = #tpu.pipeline_mode<synchronous>, transform_indices = @transform_5, window_bounds = array<i64: 1, 128>}, {pipeline_mode = #tpu.pipeline_mode<synchronous>, transform_indices = @transform_6, window_bounds = array<i64: 1, 128>}, {transform_indices = @transform_7, window_bounds = array<i64: 128, 128>}]} {
    %c0_i32 = arith.constant 0 : i32
    %0 = arith.cmpi eq, %arg1, %c0_i32 : i32
    %1 = arith.extui %0 : i1 to i32
    %c0_i32_0 = arith.constant 0 : i32
    %2 = arith.cmpi ne, %1, %c0_i32_0 : i32
    scf.if %2 {
      %cst_14 = arith.constant 0.000000e+00 : f32
      %18 = vector.broadcast %cst_14 : f32 to vector<128x128xf32>
      %c0_15 = arith.constant 0 : index
      %c0_16 = arith.constant 0 : index
      %19 = vector.load %arg10[%c0_15, %c0_16] : memref<128x128xf32, #tpu.memory_space<vmem>>, vector<128x128xf32>
      tpu.vector_store %arg10[%c0_15, %c0_16], %18 {strides = array<i32>} : memref<128x128xf32, #tpu.memory_space<vmem>>, vector<128x128xf32>,
    } else {
    }
    %c0 = arith.constant 0 : index
    %c0_1 = arith.constant 0 : index
    %3 = vector.load %arg3[%c0, %c0_1] : memref<128x128xbf16, #tpu.memory_space<vmem>>, vector<128x128xbf16>
    %c0_2 = arith.constant 0 : index
    %c0_3 = arith.constant 0 : index
    %4 = vector.load %arg6[%c0_2, %c0_3] : memref<128x128xbf16, #tpu.memory_space<vmem>>, vector<128x128xbf16>
    %cst = arith.constant dense<0.000000e+00> : vector<128x128xf32>
    %5 = tpu.matmul %3, %4, %cst {dimension_numbers = #tpu.dot_dimension_numbers<[1], [0], [0], [1], [0, 0, 1, 1], [], []>} : vector<128x128xbf16>, vector<128x128xbf16>, vector<128x128xf32> -> vector<128x128xf32>
    %c0_4 = arith.constant 0 : index
    %c0_5 = arith.constant 0 : index
    %6 = vector.load %arg8[%c0_4, %c0_5] : memref<1x128xf32, #tpu.memory_space<vmem>>, vector<1x128xf32>
    %7 = vector.broadcast %6 : vector<1x128xf32> to vector<128x128xf32>
    %8 = arith.addf %5, %7 : vector<128x128xf32>
    %c0_6 = arith.constant 0 : index
    %c0_7 = arith.constant 0 : index
    %9 = vector.load %arg10[%c0_6, %c0_7] : memref<128x128xf32, #tpu.memory_space<vmem>>, vector<128x128xf32>
    %c0_8 = arith.constant 0 : index
    %c0_9 = arith.constant 0 : index
    %10 = vector.load %arg4[%c0_8, %c0_9] : memref<128x128xbf16, #tpu.memory_space<vmem>>, vector<128x128xbf16>
    %11 = arith.truncf %8 : vector<128x128xf32> to vector<128x128xbf16>
    %cst_10 = arith.constant dense<0.000000e+00> : vector<128x128xf32>
    %12 = tpu.matmul %10, %11, %cst_10 {dimension_numbers = #tpu.dot_dimension_numbers<[1], [0], [0], [1], [0, 0, 1, 1], [], []>} : vector<128x128xbf16>, vector<128x128xbf16>, vector<128x128xf32> -> vector<128x128xf32>
    %13 = arith.addf %9, %12 : vector<128x128xf32>
    %c0_11 = arith.constant 0 : index
    %c0_12 = arith.constant 0 : index
    %14 = vector.load %arg10[%c0_11, %c0_12] : memref<128x128xf32, #tpu.memory_space<vmem>>, vector<128x128xf32>
    tpu.vector_store %arg10[%c0_11, %c0_12], %13 {strides = array<i32>} : memref<128x128xf32, #tpu.memory_space<vmem>>, vector<128x128xf32>,
    %c1_i32 = arith.constant 1 : i32
    %15 = arith.cmpi eq, %arg1, %c1_i32 : i32
    %16 = arith.extui %15 : i1 to i32
    %c0_i32_13 = arith.constant 0 : i32
    %17 = arith.cmpi ne, %16, %c0_i32_13 : i32
    scf.if %17 {
      %c0_14 = arith.constant 0 : index
      %c0_15 = arith.constant 0 : index
      %18 = vector.load %arg2[%c0_14, %c0_15] : memref<128x128xbf16, #tpu.memory_space<vmem>>, vector<128x128xbf16>
      %c0_16 = arith.constant 0 : index
      %c0_17 = arith.constant 0 : index
      %19 = vector.load %arg5[%c0_16, %c0_17] : memref<128x128xbf16, #tpu.memory_space<vmem>>, vector<128x128xbf16>
      %cst_18 = arith.constant dense<0.000000e+00> : vector<128x128xf32>
      %20 = tpu.matmul %18, %19, %cst_18 {dimension_numbers = #tpu.dot_dimension_numbers<[1], [0], [0], [1], [0, 0, 1, 1], [], []>} : vector<128x128xbf16>, vector<128x128xbf16>, vector<128x128xf32> -> vector<128x128xf32>
      %c0_19 = arith.constant 0 : index
      %c0_20 = arith.constant 0 : index
      %21 = vector.load %arg10[%c0_19, %c0_20] : memref<128x128xf32, #tpu.memory_space<vmem>>, vector<128x128xf32>
      %22 = arith.addf %21, %20 : vector<128x128xf32>
      %c0_21 = arith.constant 0 : index
      %c0_22 = arith.constant 0 : index
      %23 = vector.load %arg7[%c0_21, %c0_22] : memref<1x128xf32, #tpu.memory_space<vmem>>, vector<1x128xf32>
      %24 = vector.broadcast %23 : vector<1x128xf32> to vector<128x128xf32>
      %25 = arith.addf %22, %24 : vector<128x128xf32>
      %c0_23 = arith.constant 0 : index
      %c0_24 = arith.constant 0 : index
      %26 = vector.load %arg9[%c0_23, %c0_24] : memref<128x128xf32, #tpu.memory_space<vmem>>, vector<128x128xf32>
      tpu.vector_store %arg9[%c0_23, %c0_24], %25 {strides = array<i32>} : memref<128x128xf32, #tpu.memory_space<vmem>>, vector<128x128xf32>,
    } else {
    }
    return
  }
  func.func @transform_0(%arg0: i32, %arg1: i32) -> (i32, i32) {
    %c0_i32 = arith.constant 0 : i32
    %c0_i32_0 = arith.constant 0 : i32
    return %arg0, %c0_i32 : i32, i32
  }
  func.func @transform_1(%arg0: i32, %arg1: i32) -> (i32, i32) {
    %c0_i32 = arith.constant 0 : i32
    %c0_i32_0 = arith.constant 0 : i32
    return %arg1, %c0_i32 : i32, i32
  }
  func.func @transform_2(%arg0: i32, %arg1: i32) -> (i32, i32) {
    %c0_i32 = arith.constant 0 : i32
    return %arg0, %arg1 : i32, i32
  }
  func.func @transform_3(%arg0: i32, %arg1: i32) -> (i32, i32) {
    %c0_i32 = arith.constant 0 : i32
    %c0_i32_0 = arith.constant 0 : i32
    %c0_i32_1 = arith.constant 0 : i32
    return %c0_i32, %c0_i32_0 : i32, i32
  }
  func.func @transform_4(%arg0: i32, %arg1: i32) -> (i32, i32) {
    %c0_i32 = arith.constant 0 : i32
    %c0_i32_0 = arith.constant 0 : i32
    %c0_i32_1 = arith.constant 0 : i32
    return %c0_i32, %c0_i32_0 : i32, i32
  }
  func.func @transform_5(%arg0: i32, %arg1: i32) -> (i32, i32) {
    %c0_i32 = arith.constant 0 : i32
    %c0_i32_0 = arith.constant 0 : i32
    %c0_i32_1 = arith.constant 0 : i32
    return %c0_i32, %c0_i32_0 : i32, i32
  }
  func.func @transform_6(%arg0: i32, %arg1: i32) -> (i32, i32) {
    %c0_i32 = arith.constant 0 : i32
    %c0_i32_0 = arith.constant 0 : i32
    %c0_i32_1 = arith.constant 0 : i32
    return %c0_i32, %c0_i32_0 : i32, i32
  }
  func.func @transform_7(%arg0: i32, %arg1: i32) -> (i32, i32) {
    %c0_i32 = arith.constant 0 : i32
    %c0_i32_0 = arith.constant 0 : i32
    return %arg0, %c0_i32 : i32, i32
  }
}

</mosaic_0001>

<llo_original>
// kernel: tpu_custom_call.1
$region0: #{tpu_custom_call.1}
  #allocation0 [shape = 'u32[]', space=smem, size = 0x4, offset = 0x4, fixed_abs, tag = 'smem constant byte address 0x4 - core index']
  #allocation1 [shape = 'u32[144,128]{1,0:T(1,128)}', space=vmem, size = 0x12000, scoped, tag = 'internal scratch']
  #allocation2 [shape = 'f32[128,128]{1,0:T(8,128)}', space=vmem, size = 0x10000, scoped, tag = 'scratch operand']
  %s0 = inlined_call_operand.hbm [shape: bf16[256,128], index: 0, kind: input, shape index: {}]
  %s1 = inlined_call_operand.hbm [shape: bf16[256,128], index: 1, kind: input, shape index: {}]
  %s2 = inlined_call_operand.hbm [shape: bf16[256,256], index: 2, kind: input, shape index: {}]
  %s3 = inlined_call_operand.hbm [shape: bf16[128,128], index: 3, kind: input, shape index: {}]
  %s4 = inlined_call_operand.hbm [shape: bf16[128,128], index: 4, kind: input, shape index: {}]
  %s5 = inlined_call_operand.vmem [shape: f32[1,128], index: 5, kind: input, shape index: {}]
  %s6 = inlined_call_operand.vmem [shape: f32[1,128], index: 6, kind: input, shape index: {}]
  %s7 = inlined_call_operand.hbm [shape: f32[256,128], index: 7, kind: output, shape index: {}]
  %s8 = sld [smem:[#allocation0]]
  $region89: #{tpu_custom_call.1} parent=0
    _
  %s10 = ssub.s32 1, %s8
  %s11 = scalar_select 0, %s10, %s8
  $region1: #{tpu_custom_call.1} parent=0
    #allocation3 [shape = 'u8[65536]{0}', space=vmem, size = 0x10000, scoped, tag = 'input window, operand 0']
    #allocation4 [shape = 's32[2]{0}', space=sflag, size = 0x8, scoped, tag = 'scoped memory for tpu_custom_call.1']
    #allocation5 [shape = 's32[2]{0}', space=sflag, size = 0x8, scoped, tag = 'scoped memory for tpu_custom_call.1']
    #allocation6 [shape = 'u8[65536]{0}', space=vmem, size = 0x10000, scoped, tag = 'input window, operand 1']
    #allocation7 [shape = 's32[2]{0}', space=sflag, size = 0x8, scoped, tag = 'scoped memory for tpu_custom_call.1']
    #allocation8 [shape = 'u8[65536]{0}', space=vmem, size = 0x10000, scoped, tag = 'input window, operand 2']
    #allocation9 [shape = 'u8[32768]{0}', space=vmem, size = 0x8000, scoped, tag = 'input window, operand 3, single buffered']
    #allocation10 [shape = 's32[1]{0}', space=sflag, size = 0x4, scoped, tag = 'scoped memory for tpu_custom_call.1']
    #allocation11 [shape = 'u8[32768]{0}', space=vmem, size = 0x8000, scoped, tag = 'input window, operand 4, single buffered']
    #allocation12 [shape = 'u8[131072]{0}', space=vmem, size = 0x20000, scoped, tag = 'output window, operand 0']
    %12 = vsyncpa [#allocation4], 0
    %s13 = scalar_lea.sflag [#allocation4], 1
    %14 = vsyncpa %s13, 0
    %15 = vsyncpa [#allocation7], 0
    %s16 = scalar_lea.sflag [#allocation7], 1
    %17 = vsyncpa %s16, 0
    %18 = vsyncpa [#allocation10], 0
    %19 = vsyncpa [#allocation5], 0
    %s20 = scalar_lea.sflag [#allocation5], 1
    %21 = vsyncpa %s20, 0
    loop: start=0, step=1, limit=6
    $region2: #{tpu_custom_call.1} parent=1 // loop_pre_header
      _
    $region3: #{tpu_custom_call.1} parent=1 // loop_header
      %s23 = sphi 0, %s27
      %p24 = scmp.ge.s32.totalorder %s23, 6
      %s30 = sphi 0, %s42
      %s31 = sphi 0, %s38
      %s32 = sphi 0, %s30
      %s33 = sphi 0, %s31
      %s34 = sphi 0, %s32
      %s35 = sphi 0, %s33
      %s45 = sphi 0, %s47
      %s48 = sphi 0, %s45
      %s49 = sphi 0, %s48
      %s65 = sphi 0, %s49
      %s71 = sphi 0, %s73
      %s74 = sphi 0, %s71
      %s75 = sphi 0, %s74
      %s91 = sphi 0, %s75
      %s99 = sphi 0, %s101
      %s102 = sphi 0, %s99
      %s103 = sphi 0, %s102
      %s119 = sphi 0, %s103
      %s123 = sphi 0, %s123
      %s125 = sphi 0, %s123
      %s126 = sphi 0, %s125
      %s140 = sphi 0, %s126
      %s144 = sphi 0, %s144
      %s146 = sphi 0, %s144
      %s147 = sphi 0, %s146
      %s161 = sphi 0, %s147
      %s165 = sphi 0, %s165
      %s167 = sphi 0, %s165
      %s168 = sphi 0, %s167
      %s182 = sphi 0, %s168
      %s186 = sphi 0, %s186
      %s188 = sphi 0, %s186
      %s189 = sphi 0, %s188
      %s203 = sphi 0, %s189
      %s209 = sphi 0, %s211
      %s212 = sphi 0, %s209
      %s213 = sphi 0, %s212
      %s229 = sphi 0, %s213
    $region4: #{tpu_custom_call.1} parent=1 // loop_header_branch
      %26 = sbr.rel (%p24) target = $region8
    $region5: #{tpu_custom_call.1} parent=1 // loop_body
      %s28 = ssub.s32 %s23, 1
      %s29 = ssub.s32 %s23, 2
      %s36 = sadd.s32 1, %s31
      %p37 = scmp.ge.s32.totalorder %s36, 2
      %s38 = scalar_select %p37, 0, %s36
      %s39 = sadd.s32 1, %s30
      %s40 = scalar_select %p37, %s39, %s30
      %p41 = scmp.ge.s32.totalorder %s40, 2
      %s42 = scalar_select %p41, 0, %s40
      %s43 = ssub.s32 %s30, %s42
      %p44 = scmp.eq.s32.totalorder %s43, 0
      %s46 = sadd.s32 %s45, 1
      %s47 = scalar_select %p44, %s45, %s46
      %p50 = pneg %p44
      %p51 = scmp.eq.s32.totalorder %s23, 3
      %p52 = por %p50, %p51
      %p53 = scmp.ne.s32.totalorder %s45, %s48
      %p54 = scmp.eq.s32.totalorder %s23, 0
      %p55 = por %p53, %p54
      %p56 = scmp.ne.s32.totalorder %s45, %s48
      %p57 = scmp.eq.s32.totalorder %s28, 3
      %p58 = por %p56, %p57
      %p59 = scmp.ne.s32.totalorder %s48, %s49
      %p60 = scmp.eq.s32.totalorder %s28, 0
      %p61 = por %p59, %p60
      %p62 = scmp.ne.s32.totalorder %s48, %s49
      %p63 = scmp.eq.s32.totalorder %s29, 3
      %p64 = por %p62, %p63
      %p66 = scmp.ne.s32.totalorder %s49, %s65
      %p67 = scmp.eq.s32.totalorder %s29, 0
      %p68 = por %p66, %p67
      %s69 = ssub.s32 %s31, %s38
      %p70 = scmp.eq.s32.totalorder %s69, 0
      %s72 = sadd.s32 %s71, 1
      %s73 = scalar_select %p70, %s71, %s72
      %p76 = pneg %p70
      %p77 = scmp.eq.s32.totalorder %s23, 3
      %p78 = por %p76, %p77
      %p79 = scmp.ne.s32.totalorder %s71, %s74
      %p80 = scmp.eq.s32.totalorder %s23, 0
      %p81 = por %p79, %p80
      %p82 = scmp.ne.s32.totalorder %s71, %s74
      %p83 = scmp.eq.s32.totalorder %s28, 3
      %p84 = por %p82, %p83
      %p85 = scmp.ne.s32.totalorder %s74, %s75
      %p86 = scmp.eq.s32.totalorder %s28, 0
      %p87 = por %p85, %p86
      %p88 = scmp.ne.s32.totalorder %s74, %s75
      %p89 = scmp.eq.s32.totalorder %s29, 3
      %p90 = por %p88, %p89
      %p92 = scmp.ne.s32.totalorder %s75, %s91
      %p93 = scmp.eq.s32.totalorder %s29, 0
      %p94 = por %p92, %p93
      %s95 = ssub.s32 %s30, %s42
      %s96 = ssub.s32 %s31, %s38
      %s97 = sor.u32 %s95, %s96
      %p98 = scmp.eq.s32.totalorder %s97, 0
      %s100 = sadd.s32 %s99, 1
      %s101 = scalar_select %p98, %s99, %s100
      %p104 = pneg %p98
      %p105 = scmp.eq.s32.totalorder %s23, 3
      %p106 = por %p104, %p105
      %p107 = scmp.ne.s32.totalorder %s99, %s102
      %p108 = scmp.eq.s32.totalorder %s23, 0
      %p109 = por %p107, %p108
      %p110 = scmp.ne.s32.totalorder %s99, %s102
      %p111 = scmp.eq.s32.totalorder %s28, 3
      %p112 = por %p110, %p111
      %p113 = scmp.ne.s32.totalorder %s102, %s103
      %p114 = scmp.eq.s32.totalorder %s28, 0
      %p115 = por %p113, %p114
      %p116 = scmp.ne.s32.totalorder %s102, %s103
      %p117 = scmp.eq.s32.totalorder %s29, 3
      %p118 = por %p116, %p117
      %p120 = scmp.ne.s32.totalorder %s103, %s119
      %p121 = scmp.eq.s32.totalorder %s29, 0
      %p122 = por %p120, %p121
      %s124 = sadd.s32 %s123, 1
      %p127 = scmp.eq.s32.totalorder %s23, 3
      %p128 = scmp.ne.s32.totalorder %s123, %s125
      %p129 = scmp.eq.s32.totalorder %s23, 0
      %p130 = por %p128, %p129
      %p131 = scmp.ne.s32.totalorder %s123, %s125
      %p132 = scmp.eq.s32.totalorder %s28, 3
      %p133 = por %p131, %p132
      %p134 = scmp.ne.s32.totalorder %s125, %s126
      %p135 = scmp.eq.s32.totalorder %s28, 0
      %p136 = por %p134, %p135
      %p137 = scmp.ne.s32.totalorder %s125, %s126
      %p138 = scmp.eq.s32.totalorder %s29, 3
      %p139 = por %p137, %p138
      %p141 = scmp.ne.s32.totalorder %s126, %s140
      %p142 = scmp.eq.s32.totalorder %s29, 0
      %p143 = por %p141, %p142
      %s145 = sadd.s32 %s144, 1
      %p148 = scmp.eq.s32.totalorder %s23, 3
      %p149 = scmp.ne.s32.totalorder %s144, %s146
      %p150 = scmp.eq.s32.totalorder %s23, 0
      %p151 = por %p149, %p150
      %p152 = scmp.ne.s32.totalorder %s144, %s146
      %p153 = scmp.eq.s32.totalorder %s28, 3
      %p154 = por %p152, %p153
      %p155 = scmp.ne.s32.totalorder %s146, %s147
      %p156 = scmp.eq.s32.totalorder %s28, 0
      %p157 = por %p155, %p156
      %p158 = scmp.ne.s32.totalorder %s146, %s147
      %p159 = scmp.eq.s32.totalorder %s29, 3
      %p160 = por %p158, %p159
      %p162 = scmp.ne.s32.totalorder %s147, %s161
      %p163 = scmp.eq.s32.totalorder %s29, 0
      %p164 = por %p162, %p163
      %s166 = sadd.s32 %s165, 1
      %p169 = scmp.eq.s32.totalorder %s23, 3
      %p170 = scmp.ne.s32.totalorder %s165, %s167
      %p171 = scmp.eq.s32.totalorder %s23, 0
      %p172 = por %p170, %p171
      %p173 = scmp.ne.s32.totalorder %s165, %s167
      %p174 = scmp.eq.s32.totalorder %s28, 3
      %p175 = por %p173, %p174
      %p176 = scmp.ne.s32.totalorder %s167, %s168
      %p177 = scmp.eq.s32.totalorder %s28, 0
      %p178 = por %p176, %p177
      %p179 = scmp.ne.s32.totalorder %s167, %s168
      %p180 = scmp.eq.s32.totalorder %s29, 3
      %p181 = por %p179, %p180
      %p183 = scmp.ne.s32.totalorder %s168, %s182
      %p184 = scmp.eq.s32.totalorder %s29, 0
      %p185 = por %p183, %p184
      %s187 = sadd.s32 %s186, 1
      %p190 = scmp.eq.s32.totalorder %s23, 3
      %p191 = scmp.ne.s32.totalorder %s186, %s188
      %p192 = scmp.eq.s32.totalorder %s23, 0
      %p193 = por %p191, %p192
      %p194 = scmp.ne.s32.totalorder %s186, %s188
      %p195 = scmp.eq.s32.totalorder %s28, 3
      %p196 = por %p194, %p195
      %p197 = scmp.ne.s32.totalorder %s188, %s189
      %p198 = scmp.eq.s32.totalorder %s28, 0
      %p199 = por %p197, %p198
      %p200 = scmp.ne.s32.totalorder %s188, %s189
      %p201 = scmp.eq.s32.totalorder %s29, 3
      %p202 = por %p200, %p201
      %p204 = scmp.ne.s32.totalorder %s189, %s203
      %p205 = scmp.eq.s32.totalorder %s29, 0
      %p206 = por %p204, %p205
      %s207 = ssub.s32 %s30, %s42
      %p208 = scmp.eq.s32.totalorder %s207, 0
      %s210 = sadd.s32 %s209, 1
      %s211 = scalar_select %p208, %s209, %s210
      %p214 = pneg %p208
      %p215 = scmp.eq.s32.totalorder %s23, 3
      %p216 = por %p214, %p215
      %p217 = scmp.ne.s32.totalorder %s209, %s212
      %p218 = scmp.eq.s32.totalorder %s23, 0
      %p219 = por %p217, %p218
      %p220 = scmp.ne.s32.totalorder %s209, %s212
      %p221 = scmp.eq.s32.totalorder %s28, 3
      %p222 = por %p220, %p221
      %p223 = scmp.ne.s32.totalorder %s212, %s213
      %p224 = scmp.eq.s32.totalorder %s28, 0
      %p225 = por %p223, %p224
      %p226 = scmp.ne.s32.totalorder %s212, %s213
      %p227 = scmp.eq.s32.totalorder %s29, 3
      %p228 = por %p226, %p227
      %p230 = scmp.ne.s32.totalorder %s213, %s229
      %p231 = scmp.eq.s32.totalorder %s29, 0
      %p232 = por %p230, %p231
      %p233 = scmp.le.s32.totalorder 1, %s23
      %p234 = scmp.lt.s32.totalorder %s23, 5
      %p235 = pnand %p233, %p234
      %p236 = pneg %p235
      // Predicated region
      $region9: #{tpu_custom_call.1} parent=5 // pred_check
        _
      $region10: #{tpu_custom_call.1} parent=5 // pred_check_branch
        %238 = sbr.rel (%p235) target = $region12
      $region11: #{tpu_custom_call.1} parent=5 // pred_region
        %s239 = ssub.s32 %s23, 1
        // Predicated region
        $region13: #{tpu_custom_call.1} parent=11 // pred_check
          %p240 = pneg %p136
        $region14: #{tpu_custom_call.1} parent=11 // pred_check_branch
          %242 = sbr.rel (%p240) target = $region16
        $region15: #{tpu_custom_call.1} parent=11 // pred_region
          %s244 = ssub.s32 1024, 1024
          %245 = vsyncadd [#allocation10], %s244
          %s246 = sshll.u32 [#allocation9], 4
          %s247 = int_to_ptr.vmem [resolvable:$true] %s246
          %252 = dma.hbm_to_vmem [thread:$0]  %s3, 1024, %s247, [#allocation10], 64, 64, 4
        $region16: #{tpu_custom_call.1} parent=11 // pred_fallthru
          _
        // Predicated region
        $region17: #{tpu_custom_call.1} parent=11 // pred_check
          %p253 = pneg %p157
        $region18: #{tpu_custom_call.1} parent=11 // pred_check_branch
          %255 = sbr.rel (%p253) target = $region20
        $region19: #{tpu_custom_call.1} parent=11 // pred_region
          %s257 = ssub.s32 1024, 1024
          %258 = vsyncadd [#allocation10], %s257
          %s259 = sshll.u32 [#allocation11], 4
          %s260 = int_to_ptr.vmem [resolvable:$true] %s259
          %265 = dma.hbm_to_vmem [thread:$0]  %s4, 1024, %s260, [#allocation10], 64, 64, 4
        $region20: #{tpu_custom_call.1} parent=11 // pred_fallthru
          _
        // Predicated region
        $region21: #{tpu_custom_call.1} parent=11 // pred_check
          %p266 = pneg %p178
        $region22: #{tpu_custom_call.1} parent=11 // pred_check_branch
          %268 = sbr.rel (%p266) target = $region24
        $region23: #{tpu_custom_call.1} parent=11 // pred_region
          _
        $region24: #{tpu_custom_call.1} parent=11 // pred_fallthru
          _
        // Predicated region
        $region25: #{tpu_custom_call.1} parent=11 // pred_check
          %p269 = pneg %p199
        $region26: #{tpu_custom_call.1} parent=11 // pred_check_branch
          %271 = sbr.rel (%p269) target = $region28
        $region27: #{tpu_custom_call.1} parent=11 // pred_region
          _
        $region28: #{tpu_custom_call.1} parent=11 // pred_fallthru
          _
      $region12: #{tpu_custom_call.1} parent=5 // pred_fallthru
        _
      %p272 = scmp.lt.s32.totalorder %s23, 4
      // Predicated region
      $region29: #{tpu_custom_call.1} parent=5 // pred_check
        %p273 = pneg %p272
      $region30: #{tpu_custom_call.1} parent=5 // pred_check_branch
        %275 = sbr.rel (%p273) target = $region32
      $region31: #{tpu_custom_call.1} parent=5 // pred_region
        // Predicated region
        $region33: #{tpu_custom_call.1} parent=31 // pred_check
          %p276 = pneg %p55
        $region34: #{tpu_custom_call.1} parent=31 // pred_check_branch
          %278 = sbr.rel (%p276) target = $region36
        $region35: #{tpu_custom_call.1} parent=31 // pred_region
          %s279 = sand.u32 %s45, 1
          %s280 = scalar_lea.sflag [#allocation4], %s279
          %s281 = sand.u32 %s45, 1
          %s282 = smul.addr %s281, 64
          %s283 = scalar_lea.vmem [#allocation3], %s282
          %s284 = smul.u32 16, %s30
          %s286 = ssub.s32 1024, 1024
          %287 = vsyncadd %s280, %s286
          %s288 = smul.addr %s284, 64
          %s289 = scalar_lea.hbm %s0, %s288
          %s290 = sshll.u32 %s283, 4
          %s291 = int_to_ptr.vmem [resolvable:$true] %s290
          %296 = dma.hbm_to_vmem [thread:$0]  %s289, 1024, %s291, %s280, 64, 64, 4
        $region36: #{tpu_custom_call.1} parent=31 // pred_fallthru
          _
        // Predicated region
        $region37: #{tpu_custom_call.1} parent=31 // pred_check
          %p297 = pneg %p81
        $region38: #{tpu_custom_call.1} parent=31 // pred_check_branch
          %299 = sbr.rel (%p297) target = $region40
        $region39: #{tpu_custom_call.1} parent=31 // pred_region
          %s300 = sand.u32 %s23, 1
          %s301 = scalar_lea.sflag [#allocation7], %s300
          %s302 = sand.u32 %s71, 1
          %s303 = smul.addr %s302, 64
          %s304 = scalar_lea.vmem [#allocation6], %s303
          %s305 = smul.u32 16, %s31
          %s307 = ssub.s32 1024, 1024
          %308 = vsyncadd %s301, %s307
          %s309 = smul.addr %s305, 64
          %s310 = scalar_lea.hbm %s1, %s309
          %s311 = sshll.u32 %s304, 4
          %s312 = int_to_ptr.vmem [resolvable:$true] %s311
          %317 = dma.hbm_to_vmem [thread:$0]  %s310, 1024, %s312, %s301, 64, 64, 4
        $region40: #{tpu_custom_call.1} parent=31 // pred_fallthru
          _
        // Predicated region
        $region41: #{tpu_custom_call.1} parent=31 // pred_check
          %p318 = pneg %p109
        $region42: #{tpu_custom_call.1} parent=31 // pred_check_branch
          %320 = sbr.rel (%p318) target = $region44
        $region43: #{tpu_custom_call.1} parent=31 // pred_region
          %s321 = sand.u32 %s23, 1
          %s322 = scalar_lea.sflag [#allocation7], %s321
          %s323 = sand.u32 %s99, 1
          %s324 = smul.addr %s323, 64
          %s325 = scalar_lea.vmem [#allocation8], %s324
          %s326 = smul.u32 16, %s30
          %s328 = ssub.s32 1024, 1024
          %329 = vsyncadd %s322, %s328
          %s330 = smul.addr %s326, 2
          %s331 = sadd.s32 %s31, %s330
          %s332 = smul.addr %s331, 64
          %s333 = scalar_lea.hbm %s2, %s332
          %s334 = sshll.u32 %s325, 4
          %s335 = int_to_ptr.vmem [resolvable:$true] %s334
          %340 = dma.hbm_to_vmem [thread:$0]  %s333, 1024, %s335, %s322, 128, 64, 4
        $region44: #{tpu_custom_call.1} parent=31 // pred_fallthru
          _
      $region32: #{tpu_custom_call.1} parent=5 // pred_fallthru
        _
      %p341 = scmp.le.s32.totalorder 1, %s23
      %p342 = scmp.lt.s32.totalorder %s23, 5
      %p343 = pnand %p341, %p342
      %p344 = pneg %p343
      // Predicated region
      $region45: #{tpu_custom_call.1} parent=5 // pred_check
        _
      $region46: #{tpu_custom_call.1} parent=5 // pred_check_branch
        %346 = sbr.rel (%p343) target = $region48
      $region47: #{tpu_custom_call.1} parent=5 // pred_region
        %s347 = ssub.s32 %s23, 1
        %s348 = sand.u32 %s48, 1
        %s349 = scalar_lea.sflag [#allocation4], %s348
        %s350 = sand.u32 %s48, 1
        %s351 = smul.addr %s350, 64
        %s352 = scalar_lea.vmem [#allocation3], %s351
        // Predicated region
        $region49: #{tpu_custom_call.1} parent=47 // pred_check
          %p353 = pneg %p61
        $region50: #{tpu_custom_call.1} parent=47 // pred_check_branch
          %355 = sbr.rel (%p353) target = $region52
        $region51: #{tpu_custom_call.1} parent=47 // pred_region
          %356 = dma.done %s349, 1024
        $region52: #{tpu_custom_call.1} parent=47 // pred_fallthru
          _
        %s357 = sand.u32 %s28, 1
        %s358 = scalar_lea.sflag [#allocation7], %s357
        %s359 = sand.u32 %s74, 1
        %s360 = smul.addr %s359, 64
        %s361 = scalar_lea.vmem [#allocation6], %s360
        // Predicated region
        $region53: #{tpu_custom_call.1} parent=47 // pred_check
          %p362 = pneg %p87
        $region54: #{tpu_custom_call.1} parent=47 // pred_check_branch
          %364 = sbr.rel (%p362) target = $region56
        $region55: #{tpu_custom_call.1} parent=47 // pred_region
          %365 = dma.done %s358, 1024
        $region56: #{tpu_custom_call.1} parent=47 // pred_fallthru
          _
        %s366 = sand.u32 %s28, 1
        %s367 = scalar_lea.sflag [#allocation7], %s366
        %s368 = sand.u32 %s102, 1
        %s369 = smul.addr %s368, 64
        %s370 = scalar_lea.vmem [#allocation8], %s369
        // Predicated region
        $region57: #{tpu_custom_call.1} parent=47 // pred_check
          %p371 = pneg %p115
        $region58: #{tpu_custom_call.1} parent=47 // pred_check_branch
          %373 = sbr.rel (%p371) target = $region60
        $region59: #{tpu_custom_call.1} parent=47 // pred_region
          %374 = dma.done %s367, 1024
        $region60: #{tpu_custom_call.1} parent=47 // pred_fallthru
          _
        // Predicated region
        $region61: #{tpu_custom_call.1} parent=47 // pred_check
          %p375 = pneg %p136
        $region62: #{tpu_custom_call.1} parent=47 // pred_check_branch
          %377 = sbr.rel (%p375) target = $region64
        $region63: #{tpu_custom_call.1} parent=47 // pred_region
          %378 = dma.done [#allocation10], 1024
        $region64: #{tpu_custom_call.1} parent=47 // pred_fallthru
          _
        // Predicated region
        $region65: #{tpu_custom_call.1} parent=47 // pred_check
          %p379 = pneg %p157
        $region66: #{tpu_custom_call.1} parent=47 // pred_check_branch
          %381 = sbr.rel (%p379) target = $region68
        $region67: #{tpu_custom_call.1} parent=47 // pred_region
          %382 = dma.done [#allocation10], 1024
        $region68: #{tpu_custom_call.1} parent=47 // pred_fallthru
          _
        %s383 = sand.u32 %s48, 1
        %s384 = scalar_lea.sflag [#allocation4], %s383
        %s385 = sand.u32 %s48, 1
        %s386 = smul.addr %s385, 64
        %s387 = scalar_lea.vmem [#allocation3], %s386
        %p388 = pneg %p61
        %p389 = pneg %p58
        %s390 = sand.u32 %s28, 1
        %s391 = scalar_lea.sflag [#allocation7], %s390
        %s392 = sand.u32 %s74, 1
        %s393 = smul.addr %s392, 64
        %s394 = scalar_lea.vmem [#allocation6], %s393
        %p395 = pneg %p87
        %p396 = pneg %p84
        %s397 = sand.u32 %s28, 1
        %s398 = scalar_lea.sflag [#allocation7], %s397
        %s399 = sand.u32 %s102, 1
        %s400 = smul.addr %s399, 64
        %s401 = scalar_lea.vmem [#allocation8], %s400
        %p402 = pneg %p115
        %p403 = pneg %p112
        %p404 = pneg %p136
        %p405 = pneg %p133
        %p406 = pneg %p157
        %p407 = pneg %p154
        %p408 = pneg %p178
        %p409 = pneg %p175
        %p410 = pneg %p199
        %p411 = pneg %p196
        %p412 = pneg %p225
        %p413 = pneg %p222
        %s414 = sand.u32 %s212, 1
        %s415 = scalar_lea.sflag [#allocation5], %s414
        %s416 = sand.u32 %s212, 1
        %s417 = smul.addr %s416, 128
        %s418 = scalar_lea.vmem [#allocation12], %s417
        %s419 = smul.u32 16, %s32
        %s420 = smul.u32 16, %s33
        %s421 = smul.u32 16, %s32
        %s422 = smul.u32 16, %s32
        %p424 = scmp.eq.s32.totalorder %s33, 0
        // Predicated region
        $region69: #{tpu_custom_call.1} parent=47 // pred_check
          %p425 = pneg %p424
        $region70: #{tpu_custom_call.1} parent=47 // pred_check_branch
          %427 = sbr.rel (%p425) target = $region72
        $region71: #{tpu_custom_call.1} parent=47 // pred_region
          %428 = vst [vmem:[#allocation2] sm:$0xff] 0.0
          %429 = vst [vmem:[#allocation2 + $0x8] sm:$0xff] 0.0
          %430 = vst [vmem:[#allocation2 + $0x10] sm:$0xff] 0.0
          %431 = vst [vmem:[#allocation2 + $0x18] sm:$0xff] 0.0
          %432 = vst [vmem:[#allocation2 + $0x20] sm:$0xff] 0.0
          %433 = vst [vmem:[#allocation2 + $0x28] sm:$0xff] 0.0
          %434 = vst [vmem:[#allocation2 + $0x30] sm:$0xff] 0.0
          %435 = vst [vmem:[#allocation2 + $0x38] sm:$0xff] 0.0
          %436 = vst [vmem:[#allocation2 + $0x40] sm:$0xff] 0.0
          %437 = vst [vmem:[#allocation2 + $0x48] sm:$0xff] 0.0
          %438 = vst [vmem:[#allocation2 + $0x50] sm:$0xff] 0.0
          %439 = vst [vmem:[#allocation2 + $0x58] sm:$0xff] 0.0
          %440 = vst [vmem:[#allocation2 + $0x60] sm:$0xff] 0.0
          %441 = vst [vmem:[#allocation2 + $0x68] sm:$0xff] 0.0
          %442 = vst [vmem:[#allocation2 + $0x70] sm:$0xff] 0.0
          %443 = vst [vmem:[#allocation2 + $0x78] sm:$0xff] 0.0
        $region72: #{tpu_custom_call.1} parent=47 // pred_fallthru
          _
        %v444 = vld [vmem:[%s361] sm:$0xf]
        %v445 = vld [vmem:[%s361 + $0x4] sm:$0xf]
        %v446 = vld [vmem:[%s361 + $0x8] sm:$0xf]
        %v447 = vld [vmem:[%s361 + $0xc] sm:$0xf]
        %v448 = vld [vmem:[%s361 + $0x10] sm:$0xf]
        %v449 = vld [vmem:[%s361 + $0x14] sm:$0xf]
        %v450 = vld [vmem:[%s361 + $0x18] sm:$0xf]
        %v451 = vld [vmem:[%s361 + $0x1c] sm:$0xf]
        %v452 = vld [vmem:[%s361 + $0x20] sm:$0xf]
        %v453 = vld [vmem:[%s361 + $0x24] sm:$0xf]
        %v454 = vld [vmem:[%s361 + $0x28] sm:$0xf]
        %v455 = vld [vmem:[%s361 + $0x2c] sm:$0xf]
        %v456 = vld [vmem:[%s361 + $0x30] sm:$0xf]
        %v457 = vld [vmem:[%s361 + $0x34] sm:$0xf]
        %v458 = vld [vmem:[%s361 + $0x38] sm:$0xf]
        %v459 = vld [vmem:[%s361 + $0x3c] sm:$0xf]
        %v460 = vld [vmem:[#allocation11] sm:$0xf]
        %v461 = vld [vmem:[#allocation11 + $0x4] sm:$0xf]
        %v462 = vld [vmem:[#allocation11 + $0x8] sm:$0xf]
        %v463 = vld [vmem:[#allocation11 + $0xc] sm:$0xf]
        %v464 = vld [vmem:[#allocation11 + $0x10] sm:$0xf]
        %v465 = vld [vmem:[#allocation11 + $0x14] sm:$0xf]
        %v466 = vld [vmem:[#allocation11 + $0x18] sm:$0xf]
        %v467 = vld [vmem:[#allocation11 + $0x1c] sm:$0xf]
        %v468 = vld [vmem:[#allocation11 + $0x20] sm:$0xf]
        %v469 = vld [vmem:[#allocation11 + $0x24] sm:$0xf]
        %v470 = vld [vmem:[#allocation11 + $0x28] sm:$0xf]
        %v471 = vld [vmem:[#allocation11 + $0x2c] sm:$0xf]
        %v472 = vld [vmem:[#allocation11 + $0x30] sm:$0xf]
        %v473 = vld [vmem:[#allocation11 + $0x34] sm:$0xf]
        %v474 = vld [vmem:[#allocation11 + $0x38] sm:$0xf]
        %v475 = vld [vmem:[#allocation11 + $0x3c] sm:$0xf]
        %v476 = vld [vmem:[%s6] sm:$0x1]
        %v478 = vlaneseq
        %v479 = vshrl.u32 %v478, 7
        %v480 = vsub.s32 0, %v479
        %v481 = vrot.slane %v476, %v480
        %v499 = vunpack.c.l.b16 %v444
        %v500 = vunpack.c.l.b16 %v445
        %v501 = vunpack.c.l.b16 %v446
        %v502 = vunpack.c.l.b16 %v447
        %v503 = vunpack.c.l.b16 %v448
        %v504 = vunpack.c.l.b16 %v449
        %v505 = vunpack.c.l.b16 %v450
        %v506 = vunpack.c.l.b16 %v451
        %v507 = vunpack.c.l.b16 %v452
        %v508 = vunpack.c.l.b16 %v453
        %v509 = vunpack.c.l.b16 %v454
        %v510 = vunpack.c.l.b16 %v455
        %v511 = vunpack.c.l.b16 %v456
        %v512 = vunpack.c.l.b16 %v457
        %v513 = vunpack.c.l.b16 %v458
        %v514 = vunpack.c.l.b16 %v459
        %v515 = vpack.c.b16 %v500, %v499
        %v516 = vpack.c.b16 %v502, %v501
        %v517 = vpack.c.b16 %v504, %v503
        %v518 = vpack.c.b16 %v506, %v505
        %v519 = vpack.c.b16 %v508, %v507
        %v520 = vpack.c.b16 %v510, %v509
        %v521 = vpack.c.b16 %v512, %v511
        %v522 = vpack.c.b16 %v514, %v513
        %v547 = vunpack.c.l.b16 %v460
        %v548 = vunpack.c.l.b16 %v461
        %v549 = vunpack.c.l.b16 %v462
        %v550 = vunpack.c.l.b16 %v463
        %v551 = vunpack.c.l.b16 %v464
        %v552 = vunpack.c.l.b16 %v465
        %v553 = vunpack.c.l.b16 %v466
        %v554 = vunpack.c.l.b16 %v467
        %v555 = vunpack.c.l.b16 %v468
        %v556 = vunpack.c.l.b16 %v469
        %v557 = vunpack.c.l.b16 %v470
        %v558 = vunpack.c.l.b16 %v471
        %v559 = vunpack.c.l.b16 %v472
        %v560 = vunpack.c.l.b16 %v473
        %v561 = vunpack.c.l.b16 %v474
        %v562 = vunpack.c.l.b16 %v475
        %v563 = vpack.c.b16 %v548, %v547
        %v564 = vpack.c.b16 %v550, %v549
        %v565 = vpack.c.b16 %v552, %v551
        %v566 = vpack.c.b16 %v554, %v553
        %v567 = vpack.c.b16 %v556, %v555
        %v568 = vpack.c.b16 %v558, %v557
        %v569 = vpack.c.b16 %v560, %v559
        %v570 = vpack.c.b16 %v562, %v561
        %579 = vmatprep.subr.bf16.mxu0 0
        %580 = vmatpush1.bf16.msra.mxu0 %v563
        %581 = vmatprep.subr.bf16.mxu0 0
        %582 = vmatpush1.bf16.msra.mxu0 %v564
        %583 = vmatprep.subr.bf16.mxu0 0
        %584 = vmatpush1.bf16.msra.mxu0 %v565
        %585 = vmatprep.subr.bf16.mxu0 0
        %586 = vmatpush1.bf16.msra.mxu0 %v566
        %587 = vmatprep.subr.bf16.mxu0 0
        %588 = vmatpush1.bf16.msra.mxu0 %v567
        %589 = vmatprep.subr.bf16.mxu0 0
        %590 = vmatpush1.bf16.msra.mxu0 %v568
        %591 = vmatprep.subr.bf16.mxu0 0
        %592 = vmatpush1.bf16.msra.mxu0 %v569
        %593 = vmatprep.subr.bf16.mxu0 0
        %594 = vmatpush1.bf16.msra.mxu0 %v570
        %595 = vmatprep.subr.bf16.mxu0 0
        %596 = vmatpush1.bf16.msra.mxu0 0
        %597 = vmatprep.subr.bf16.mxu0 0
        %598 = vmatpush1.bf16.msra.mxu0 0
        %599 = vmatprep.subr.bf16.mxu0 0
        %600 = vmatpush1.bf16.msra.mxu0 0
        %601 = vmatprep.subr.bf16.mxu0 0
        %602 = vmatpush1.bf16.msra.mxu0 0
        %603 = vmatprep.subr.bf16.mxu0 0
        %604 = vmatpush1.bf16.msra.mxu0 0
        %605 = vmatprep.subr.bf16.mxu0 0
        %606 = vmatpush1.bf16.msra.mxu0 0
        %607 = vmatprep.subr.bf16.mxu0 0
        %608 = vmatpush1.bf16.msra.mxu0 0
        %609 = vmatprep.subr.bf16.mxu0 0
        %610 = vmatpush1.bf16.msra.mxu0 0
        %611 = vmatprep.mubr.bf16.mxu0 0
        %612 = vmatmul.mubr.bf16.gmra.mrb[0].mxu0 %v515
        %v613 = vpop.f32.mrb[0].mxu0
        %v614 = vadd.f32 %v481, %v613
        %v615 = vpop.f32.mrb[0].mxu0
        %v616 = vpop.f32.mrb[0].mxu0
        %v617 = vadd.f32 %v481, %v616
        %v618 = vpop.f32.mrb[0].mxu0
        %619 = vmatprep.mubr.bf16.mxu0 0
        %620 = vmatmul.mubr.bf16.gmra.mrb[0].mxu0 %v516
        %v621 = vpop.f32.mrb[0].mxu0
        %v622 = vadd.f32 %v481, %v621
        %v623 = vpop.f32.mrb[0].mxu0
        %v624 = vpop.f32.mrb[0].mxu0
        %v625 = vadd.f32 %v481, %v624
        %v626 = vpop.f32.mrb[0].mxu0
        %627 = vmatprep.mubr.bf16.mxu0 0
        %628 = vmatmul.mubr.bf16.gmra.mrb[0].mxu0 %v517
        %v629 = vpop.f32.mrb[0].mxu0
        %v630 = vadd.f32 %v481, %v629
        %v631 = vpop.f32.mrb[0].mxu0
        %v632 = vpop.f32.mrb[0].mxu0
        %v633 = vadd.f32 %v481, %v632
        %v634 = vpop.f32.mrb[0].mxu0
        %635 = vmatprep.mubr.bf16.mxu0 0
        %636 = vmatmul.mubr.bf16.gmra.mrb[0].mxu0 %v518
        %v637 = vpop.f32.mrb[0].mxu0
        %v638 = vadd.f32 %v481, %v637
        %v639 = vpop.f32.mrb[0].mxu0
        %v640 = vpop.f32.mrb[0].mxu0
        %v641 = vadd.f32 %v481, %v640
        %v642 = vpop.f32.mrb[0].mxu0
        %643 = vmatprep.mubr.bf16.mxu0 0
        %644 = vmatmul.mubr.bf16.gmra.mrb[0].mxu0 %v519
        %v645 = vpop.f32.mrb[0].mxu0
        %v646 = vadd.f32 %v481, %v645
        %v647 = vpop.f32.mrb[0].mxu0
        %v648 = vpop.f32.mrb[0].mxu0
        %v649 = vadd.f32 %v481, %v648
        %v650 = vpop.f32.mrb[0].mxu0
        %651 = vmatprep.mubr.bf16.mxu0 0
        %652 = vmatmul.mubr.bf16.gmra.mrb[0].mxu0 %v520
        %v653 = vpop.f32.mrb[0].mxu0
        %v654 = vadd.f32 %v481, %v653
        %v655 = vpop.f32.mrb[0].mxu0
        %v656 = vpop.f32.mrb[0].mxu0
        %v657 = vadd.f32 %v481, %v656
        %v658 = vpop.f32.mrb[0].mxu0
        %659 = vmatprep.mubr.bf16.mxu0 0
        %660 = vmatmul.mubr.bf16.gmra.mrb[0].mxu0 %v521
        %v661 = vpop.f32.mrb[0].mxu0
        %v662 = vadd.f32 %v481, %v661
        %v663 = vpop.f32.mrb[0].mxu0
        %v664 = vpop.f32.mrb[0].mxu0
        %v665 = vadd.f32 %v481, %v664
        %v666 = vpop.f32.mrb[0].mxu0
        %667 = vmatprep.mubr.bf16.mxu0 0
        %668 = vmatmul.mubr.bf16.gmra.mrb[0].mxu0 %v522
        %v669 = vpop.f32.mrb[0].mxu0
        %v670 = vadd.f32 %v481, %v669
        %v671 = vpop.f32.mrb[0].mxu0
        %v672 = vpop.f32.mrb[0].mxu0
        %v673 = vadd.f32 %v481, %v672
        %v674 = vpop.f32.mrb[0].mxu0
        %675 = vdwg.mxu0
        %v676 = vld [vmem:[#allocation2] sm:$0xff]
        %v677 = vld [vmem:[#allocation2 + $0x8] sm:$0xff]
        %v678 = vld [vmem:[#allocation2 + $0x10] sm:$0xff]
        %v679 = vld [vmem:[#allocation2 + $0x18] sm:$0xff]
        %v680 = vld [vmem:[#allocation2 + $0x20] sm:$0xff]
        %v681 = vld [vmem:[#allocation2 + $0x28] sm:$0xff]
        %v682 = vld [vmem:[#allocation2 + $0x30] sm:$0xff]
        %v683 = vld [vmem:[#allocation2 + $0x38] sm:$0xff]
        %v684 = vld [vmem:[#allocation2 + $0x40] sm:$0xff]
        %v685 = vld [vmem:[#allocation2 + $0x48] sm:$0xff]
        %v686 = vld [vmem:[#allocation2 + $0x50] sm:$0xff]
        %v687 = vld [vmem:[#allocation2 + $0x58] sm:$0xff]
        %v688 = vld [vmem:[#allocation2 + $0x60] sm:$0xff]
        %v689 = vld [vmem:[#allocation2 + $0x68] sm:$0xff]
        %v690 = vld [vmem:[#allocation2 + $0x70] sm:$0xff]
        %v691 = vld [vmem:[#allocation2 + $0x78] sm:$0xff]
        %v692 = vld [vmem:[%s370] sm:$0xf]
        %v693 = vld [vmem:[%s370 + $0x4] sm:$0xf]
        %v694 = vld [vmem:[%s370 + $0x8] sm:$0xf]
        %v695 = vld [vmem:[%s370 + $0xc] sm:$0xf]
        %v696 = vld [vmem:[%s370 + $0x10] sm:$0xf]
        %v697 = vld [vmem:[%s370 + $0x14] sm:$0xf]
        %v698 = vld [vmem:[%s370 + $0x18] sm:$0xf]
        %v699 = vld [vmem:[%s370 + $0x1c] sm:$0xf]
        %v700 = vld [vmem:[%s370 + $0x20] sm:$0xf]
        %v701 = vld [vmem:[%s370 + $0x24] sm:$0xf]
        %v702 = vld [vmem:[%s370 + $0x28] sm:$0xf]
        %v703 = vld [vmem:[%s370 + $0x2c] sm:$0xf]
        %v704 = vld [vmem:[%s370 + $0x30] sm:$0xf]
        %v705 = vld [vmem:[%s370 + $0x34] sm:$0xf]
        %v706 = vld [vmem:[%s370 + $0x38] sm:$0xf]
        %v707 = vld [vmem:[%s370 + $0x3c] sm:$0xf]
        %v708 = vpack.c.bf16 %v617, %v614
        %v709 = vpack.c.bf16 %v625, %v622
        %v710 = vpack.c.bf16 %v633, %v630
        %v711 = vpack.c.bf16 %v641, %v638
        %v712 = vpack.c.bf16 %v649, %v646
        %v713 = vpack.c.bf16 %v657, %v654
        %v714 = vpack.c.bf16 %v665, %v662
        %v715 = vpack.c.bf16 %v673, %v670
        %v732 = vunpack.c.l.b16 %v692
        %v733 = vunpack.c.l.b16 %v693
        %v734 = vunpack.c.l.b16 %v694
        %v735 = vunpack.c.l.b16 %v695
        %v736 = vunpack.c.l.b16 %v696
        %v737 = vunpack.c.l.b16 %v697
        %v738 = vunpack.c.l.b16 %v698
        %v739 = vunpack.c.l.b16 %v699
        %v740 = vunpack.c.l.b16 %v700
        %v741 = vunpack.c.l.b16 %v701
        %v742 = vunpack.c.l.b16 %v702
        %v743 = vunpack.c.l.b16 %v703
        %v744 = vunpack.c.l.b16 %v704
        %v745 = vunpack.c.l.b16 %v705
        %v746 = vunpack.c.l.b16 %v706
        %v747 = vunpack.c.l.b16 %v707
        %v748 = vpack.c.b16 %v733, %v732
        %v749 = vpack.c.b16 %v735, %v734
        %v750 = vpack.c.b16 %v737, %v736
        %v751 = vpack.c.b16 %v739, %v738
        %v752 = vpack.c.b16 %v741, %v740
        %v753 = vpack.c.b16 %v743, %v742
        %v754 = vpack.c.b16 %v745, %v744
        %v755 = vpack.c.b16 %v747, %v746
        %764 = vmatprep.subr.bf16.mxu0 0
        %765 = vmatpush1.bf16.msra.mxu0 %v708
        %766 = vmatprep.subr.bf16.mxu0 0
        %767 = vmatpush1.bf16.msra.mxu0 %v709
        %768 = vmatprep.subr.bf16.mxu0 0
        %769 = vmatpush1.bf16.msra.mxu0 %v710
        %770 = vmatprep.subr.bf16.mxu0 0
        %771 = vmatpush1.bf16.msra.mxu0 %v711
        %772 = vmatprep.subr.bf16.mxu0 0
        %773 = vmatpush1.bf16.msra.mxu0 %v712
        %774 = vmatprep.subr.bf16.mxu0 0
        %775 = vmatpush1.bf16.msra.mxu0 %v713
        %776 = vmatprep.subr.bf16.mxu0 0
        %777 = vmatpush1.bf16.msra.mxu0 %v714
        %778 = vmatprep.subr.bf16.mxu0 0
        %779 = vmatpush1.bf16.msra.mxu0 %v715
        %780 = vmatprep.subr.bf16.mxu0 0
        %781 = vmatpush1.bf16.msra.mxu0 0
        %782 = vmatprep.subr.bf16.mxu0 0
        %783 = vmatpush1.bf16.msra.mxu0 0
        %784 = vmatprep.subr.bf16.mxu0 0
        %785 = vmatpush1.bf16.msra.mxu0 0
        %786 = vmatprep.subr.bf16.mxu0 0
        %787 = vmatpush1.bf16.msra.mxu0 0
        %788 = vmatprep.subr.bf16.mxu0 0
        %789 = vmatpush1.bf16.msra.mxu0 0
        %790 = vmatprep.subr.bf16.mxu0 0
        %791 = vmatpush1.bf16.msra.mxu0 0
        %792 = vmatprep.subr.bf16.mxu0 0
        %793 = vmatpush1.bf16.msra.mxu0 0
        %794 = vmatprep.subr.bf16.mxu0 0
        %795 = vmatpush1.bf16.msra.mxu0 0
        %796 = vmatprep.mubr.bf16.mxu0 0
        %797 = vmatmul.mubr.bf16.gmra.mrb[0].mxu0 %v748
        %v798 = vpop.f32.mrb[0].mxu0
        %v799 = vadd.f32 0.0, %v798
        %v800 = vpop.f32.mrb[0].mxu0
        %v801 = vpop.f32.mrb[0].mxu0
        %v802 = vadd.f32 0.0, %v801
        %v803 = vpop.f32.mrb[0].mxu0
        %804 = vmatprep.mubr.bf16.mxu0 0
        %805 = vmatmul.mubr.bf16.gmra.mrb[0].mxu0 %v749
        %v806 = vpop.f32.mrb[0].mxu0
        %v807 = vadd.f32 0.0, %v806
        %v808 = vpop.f32.mrb[0].mxu0
        %v809 = vpop.f32.mrb[0].mxu0
        %v810 = vadd.f32 0.0, %v809
        %v811 = vpop.f32.mrb[0].mxu0
        %812 = vmatprep.mubr.bf16.mxu0 0
        %813 = vmatmul.mubr.bf16.gmra.mrb[0].mxu0 %v750
        %v814 = vpop.f32.mrb[0].mxu0
        %v815 = vadd.f32 0.0, %v814
        %v816 = vpop.f32.mrb[0].mxu0
        %v817 = vpop.f32.mrb[0].mxu0
        %v818 = vadd.f32 0.0, %v817
        %v819 = vpop.f32.mrb[0].mxu0
        %820 = vmatprep.mubr.bf16.mxu0 0
        %821 = vmatmul.mubr.bf16.gmra.mrb[0].mxu0 %v751
        %v822 = vpop.f32.mrb[0].mxu0
        %v823 = vadd.f32 0.0, %v822
        %v824 = vpop.f32.mrb[0].mxu0
        %v825 = vpop.f32.mrb[0].mxu0
        %v826 = vadd.f32 0.0, %v825
        %v827 = vpop.f32.mrb[0].mxu0
        %828 = vmatprep.mubr.bf16.mxu0 0
        %829 = vmatmul.mubr.bf16.gmra.mrb[0].mxu0 %v752
        %v830 = vpop.f32.mrb[0].mxu0
        %v831 = vadd.f32 0.0, %v830
        %v832 = vpop.f32.mrb[0].mxu0
        %v833 = vpop.f32.mrb[0].mxu0
        %v834 = vadd.f32 0.0, %v833
        %v835 = vpop.f32.mrb[0].mxu0
        %836 = vmatprep.mubr.bf16.mxu0 0
        %837 = vmatmul.mubr.bf16.gmra.mrb[0].mxu0 %v753
        %v838 = vpop.f32.mrb[0].mxu0
        %v839 = vadd.f32 0.0, %v838
        %v840 = vpop.f32.mrb[0].mxu0
        %v841 = vpop.f32.mrb[0].mxu0
        %v842 = vadd.f32 0.0, %v841
        %v843 = vpop.f32.mrb[0].mxu0
        %844 = vmatprep.mubr.bf16.mxu0 0
        %845 = vmatmul.mubr.bf16.gmra.mrb[0].mxu0 %v754
        %v846 = vpop.f32.mrb[0].mxu0
        %v847 = vadd.f32 0.0, %v846
        %v848 = vpop.f32.mrb[0].mxu0
        %v849 = vpop.f32.mrb[0].mxu0
        %v850 = vadd.f32 0.0, %v849
        %v851 = vpop.f32.mrb[0].mxu0
        %852 = vmatprep.mubr.bf16.mxu0 0
        %853 = vmatmul.mubr.bf16.gmra.mrb[0].mxu0 %v755
        %v854 = vpop.f32.mrb[0].mxu0
        %v855 = vadd.f32 0.0, %v854
        %v856 = vpop.f32.mrb[0].mxu0
        %v857 = vpop.f32.mrb[0].mxu0
        %v858 = vadd.f32 0.0, %v857
        %v859 = vpop.f32.mrb[0].mxu0
        %860 = vdwg.mxu0
        %v861 = vadd.f32 %v676, %v799
        %v862 = vadd.f32 %v677, %v802
        %v863 = vadd.f32 %v678, %v807
        %v864 = vadd.f32 %v679, %v810
        %v865 = vadd.f32 %v680, %v815
        %v866 = vadd.f32 %v681, %v818
        %v867 = vadd.f32 %v682, %v823
        %v868 = vadd.f32 %v683, %v826
        %v869 = vadd.f32 %v684, %v831
        %v870 = vadd.f32 %v685, %v834
        %v871 = vadd.f32 %v686, %v839
        %v872 = vadd.f32 %v687, %v842
        %v873 = vadd.f32 %v688, %v847
        %v874 = vadd.f32 %v689, %v850
        %v875 = vadd.f32 %v690, %v855
        %v876 = vadd.f32 %v691, %v858
        %877 = vst [vmem:[#allocation2] sm:$0xff] %v861
        %878 = vst [vmem:[#allocation2 + $0x8] sm:$0xff] %v862
        %879 = vst [vmem:[#allocation2 + $0x10] sm:$0xff] %v863
        %880 = vst [vmem:[#allocation2 + $0x18] sm:$0xff] %v864
        %881 = vst [vmem:[#allocation2 + $0x20] sm:$0xff] %v865
        %882 = vst [vmem:[#allocation2 + $0x28] sm:$0xff] %v866
        %883 = vst [vmem:[#allocation2 + $0x30] sm:$0xff] %v867
        %884 = vst [vmem:[#allocation2 + $0x38] sm:$0xff] %v868
        %885 = vst [vmem:[#allocation2 + $0x40] sm:$0xff] %v869
        %886 = vst [vmem:[#allocation2 + $0x48] sm:$0xff] %v870
        %887 = vst [vmem:[#allocation2 + $0x50] sm:$0xff] %v871
        %888 = vst [vmem:[#allocation2 + $0x58] sm:$0xff] %v872
        %889 = vst [vmem:[#allocation2 + $0x60] sm:$0xff] %v873
        %890 = vst [vmem:[#allocation2 + $0x68] sm:$0xff] %v874
        %891 = vst [vmem:[#allocation2 + $0x70] sm:$0xff] %v875
        %892 = vst [vmem:[#allocation2 + $0x78] sm:$0xff] %v876
        %p893 = scmp.eq.s32.totalorder %s33, 1
        // Predicated region
        $region73: #{tpu_custom_call.1} parent=47 // pred_check
          %p894 = pneg %p893
        $region74: #{tpu_custom_call.1} parent=47 // pred_check_branch
          %896 = sbr.rel (%p894) target = $region76
        $region75: #{tpu_custom_call.1} parent=47 // pred_region
          %v897 = vld [vmem:[%s352] sm:$0xf]
          %v898 = vld [vmem:[%s352 + $0x4] sm:$0xf]
          %v899 = vld [vmem:[%s352 + $0x8] sm:$0xf]
          %v900 = vld [vmem:[%s352 + $0xc] sm:$0xf]
          %v901 = vld [vmem:[%s352 + $0x10] sm:$0xf]
          %v902 = vld [vmem:[%s352 + $0x14] sm:$0xf]
          %v903 = vld [vmem:[%s352 + $0x18] sm:$0xf]
          %v904 = vld [vmem:[%s352 + $0x1c] sm:$0xf]
          %v905 = vld [vmem:[%s352 + $0x20] sm:$0xf]
          %v906 = vld [vmem:[%s352 + $0x24] sm:$0xf]
          %v907 = vld [vmem:[%s352 + $0x28] sm:$0xf]
          %v908 = vld [vmem:[%s352 + $0x2c] sm:$0xf]
          %v909 = vld [vmem:[%s352 + $0x30] sm:$0xf]
          %v910 = vld [vmem:[%s352 + $0x34] sm:$0xf]
          %v911 = vld [vmem:[%s352 + $0x38] sm:$0xf]
          %v912 = vld [vmem:[%s352 + $0x3c] sm:$0xf]
          %v913 = vld [vmem:[#allocation9] sm:$0xf]
          %v914 = vld [vmem:[#allocation9 + $0x4] sm:$0xf]
          %v915 = vld [vmem:[#allocation9 + $0x8] sm:$0xf]
          %v916 = vld [vmem:[#allocation9 + $0xc] sm:$0xf]
          %v917 = vld [vmem:[#allocation9 + $0x10] sm:$0xf]
          %v918 = vld [vmem:[#allocation9 + $0x14] sm:$0xf]
          %v919 = vld [vmem:[#allocation9 + $0x18] sm:$0xf]
          %v920 = vld [vmem:[#allocation9 + $0x1c] sm:$0xf]
          %v921 = vld [vmem:[#allocation9 + $0x20] sm:$0xf]
          %v922 = vld [vmem:[#allocation9 + $0x24] sm:$0xf]
          %v923 = vld [vmem:[#allocation9 + $0x28] sm:$0xf]
          %v924 = vld [vmem:[#allocation9 + $0x2c] sm:$0xf]
          %v925 = vld [vmem:[#allocation9 + $0x30] sm:$0xf]
          %v926 = vld [vmem:[#allocation9 + $0x34] sm:$0xf]
          %v927 = vld [vmem:[#allocation9 + $0x38] sm:$0xf]
          %v928 = vld [vmem:[#allocation9 + $0x3c] sm:$0xf]
          %v945 = vunpack.c.l.b16 %v897
          %v946 = vunpack.c.l.b16 %v898
          %v947 = vunpack.c.l.b16 %v899
          %v948 = vunpack.c.l.b16 %v900
          %v949 = vunpack.c.l.b16 %v901
          %v950 = vunpack.c.l.b16 %v902
          %v951 = vunpack.c.l.b16 %v903
          %v952 = vunpack.c.l.b16 %v904
          %v953 = vunpack.c.l.b16 %v905
          %v954 = vunpack.c.l.b16 %v906
          %v955 = vunpack.c.l.b16 %v907
          %v956 = vunpack.c.l.b16 %v908
          %v957 = vunpack.c.l.b16 %v909
          %v958 = vunpack.c.l.b16 %v910
          %v959 = vunpack.c.l.b16 %v911
          %v960 = vunpack.c.l.b16 %v912
          %v961 = vpack.c.b16 %v946, %v945
          %v962 = vpack.c.b16 %v948, %v947
          %v963 = vpack.c.b16 %v950, %v949
          %v964 = vpack.c.b16 %v952, %v951
          %v965 = vpack.c.b16 %v954, %v953
          %v966 = vpack.c.b16 %v956, %v955
          %v967 = vpack.c.b16 %v958, %v957
          %v968 = vpack.c.b16 %v960, %v959
          %v993 = vunpack.c.l.b16 %v913
          %v994 = vunpack.c.l.b16 %v914
          %v995 = vunpack.c.l.b16 %v915
          %v996 = vunpack.c.l.b16 %v916
          %v997 = vunpack.c.l.b16 %v917
          %v998 = vunpack.c.l.b16 %v918
          %v999 = vunpack.c.l.b16 %v919
          %v1000 = vunpack.c.l.b16 %v920
          %v1001 = vunpack.c.l.b16 %v921
          %v1002 = vunpack.c.l.b16 %v922
          %v1003 = vunpack.c.l.b16 %v923
          %v1004 = vunpack.c.l.b16 %v924
          %v1005 = vunpack.c.l.b16 %v925
          %v1006 = vunpack.c.l.b16 %v926
          %v1007 = vunpack.c.l.b16 %v927
          %v1008 = vunpack.c.l.b16 %v928
          %v1009 = vpack.c.b16 %v994, %v993
          %v1010 = vpack.c.b16 %v996, %v995
          %v1011 = vpack.c.b16 %v998, %v997
          %v1012 = vpack.c.b16 %v1000, %v999
          %v1013 = vpack.c.b16 %v1002, %v1001
          %v1014 = vpack.c.b16 %v1004, %v1003
          %v1015 = vpack.c.b16 %v1006, %v1005
          %v1016 = vpack.c.b16 %v1008, %v1007
          %1025 = vmatprep.subr.bf16.mxu0 0
          %1026 = vmatpush1.bf16.msra.mxu0 %v1009
          %1027 = vmatprep.subr.bf16.mxu0 0
          %1028 = vmatpush1.bf16.msra.mxu0 %v1010
          %1029 = vmatprep.subr.bf16.mxu0 0
          %1030 = vmatpush1.bf16.msra.mxu0 %v1011
          %1031 = vmatprep.subr.bf16.mxu0 0
          %1032 = vmatpush1.bf16.msra.mxu0 %v1012
          %1033 = vmatprep.subr.bf16.mxu0 0
          %1034 = vmatpush1.bf16.msra.mxu0 %v1013
          %1035 = vmatprep.subr.bf16.mxu0 0
          %1036 = vmatpush1.bf16.msra.mxu0 %v1014
          %1037 = vmatprep.subr.bf16.mxu0 0
          %1038 = vmatpush1.bf16.msra.mxu0 %v1015
          %1039 = vmatprep.subr.bf16.mxu0 0
          %1040 = vmatpush1.bf16.msra.mxu0 %v1016
          %1041 = vmatprep.subr.bf16.mxu0 0
          %1042 = vmatpush1.bf16.msra.mxu0 0
          %1043 = vmatprep.subr.bf16.mxu0 0
          %1044 = vmatpush1.bf16.msra.mxu0 0
          %1045 = vmatprep.subr.bf16.mxu0 0
          %1046 = vmatpush1.bf16.msra.mxu0 0
          %1047 = vmatprep.subr.bf16.mxu0 0
          %1048 = vmatpush1.bf16.msra.mxu0 0
          %1049 = vmatprep.subr.bf16.mxu0 0
          %1050 = vmatpush1.bf16.msra.mxu0 0
          %1051 = vmatprep.subr.bf16.mxu0 0
          %1052 = vmatpush1.bf16.msra.mxu0 0
          %1053 = vmatprep.subr.bf16.mxu0 0
          %1054 = vmatpush1.bf16.msra.mxu0 0
          %1055 = vmatprep.subr.bf16.mxu0 0
          %1056 = vmatpush1.bf16.msra.mxu0 0
          %1057 = vmatprep.mubr.bf16.mxu0 0
          %1058 = vmatmul.mubr.bf16.gmra.mrb[0].mxu0 %v961
          %v1059 = vpop.f32.mrb[0].mxu0
          %v1060 = vadd.f32 0.0, %v1059
          %v1061 = vpop.f32.mrb[0].mxu0
          %v1062 = vpop.f32.mrb[0].mxu0
          %v1063 = vadd.f32 0.0, %v1062
          %v1064 = vpop.f32.mrb[0].mxu0
          %1065 = vmatprep.mubr.bf16.mxu0 0
          %1066 = vmatmul.mubr.bf16.gmra.mrb[0].mxu0 %v962
          %v1067 = vpop.f32.mrb[0].mxu0
          %v1068 = vadd.f32 0.0, %v1067
          %v1069 = vpop.f32.mrb[0].mxu0
          %v1070 = vpop.f32.mrb[0].mxu0
          %v1071 = vadd.f32 0.0, %v1070
          %v1072 = vpop.f32.mrb[0].mxu0
          %1073 = vmatprep.mubr.bf16.mxu0 0
          %1074 = vmatmul.mubr.bf16.gmra.mrb[0].mxu0 %v963
          %v1075 = vpop.f32.mrb[0].mxu0
          %v1076 = vadd.f32 0.0, %v1075
          %v1077 = vpop.f32.mrb[0].mxu0
          %v1078 = vpop.f32.mrb[0].mxu0
          %v1079 = vadd.f32 0.0, %v1078
          %v1080 = vpop.f32.mrb[0].mxu0
          %1081 = vmatprep.mubr.bf16.mxu0 0
          %1082 = vmatmul.mubr.bf16.gmra.mrb[0].mxu0 %v964
          %v1083 = vpop.f32.mrb[0].mxu0
          %v1084 = vadd.f32 0.0, %v1083
          %v1085 = vpop.f32.mrb[0].mxu0
          %v1086 = vpop.f32.mrb[0].mxu0
          %v1087 = vadd.f32 0.0, %v1086
          %v1088 = vpop.f32.mrb[0].mxu0
          %1089 = vmatprep.mubr.bf16.mxu0 0
          %1090 = vmatmul.mubr.bf16.gmra.mrb[0].mxu0 %v965
          %v1091 = vpop.f32.mrb[0].mxu0
          %v1092 = vadd.f32 0.0, %v1091
          %v1093 = vpop.f32.mrb[0].mxu0
          %v1094 = vpop.f32.mrb[0].mxu0
          %v1095 = vadd.f32 0.0, %v1094
          %v1096 = vpop.f32.mrb[0].mxu0
          %1097 = vmatprep.mubr.bf16.mxu0 0
          %1098 = vmatmul.mubr.bf16.gmra.mrb[0].mxu0 %v966
          %v1099 = vpop.f32.mrb[0].mxu0
          %v1100 = vadd.f32 0.0, %v1099
          %v1101 = vpop.f32.mrb[0].mxu0
          %v1102 = vpop.f32.mrb[0].mxu0
          %v1103 = vadd.f32 0.0, %v1102
          %v1104 = vpop.f32.mrb[0].mxu0
          %1105 = vmatprep.mubr.bf16.mxu0 0
          %1106 = vmatmul.mubr.bf16.gmra.mrb[0].mxu0 %v967
          %v1107 = vpop.f32.mrb[0].mxu0
          %v1108 = vadd.f32 0.0, %v1107
          %v1109 = vpop.f32.mrb[0].mxu0
          %v1110 = vpop.f32.mrb[0].mxu0
          %v1111 = vadd.f32 0.0, %v1110
          %v1112 = vpop.f32.mrb[0].mxu0
          %1113 = vmatprep.mubr.bf16.mxu0 0
          %1114 = vmatmul.mubr.bf16.gmra.mrb[0].mxu0 %v968
          %v1115 = vpop.f32.mrb[0].mxu0
          %v1116 = vadd.f32 0.0, %v1115
          %v1117 = vpop.f32.mrb[0].mxu0
          %v1118 = vpop.f32.mrb[0].mxu0
          %v1119 = vadd.f32 0.0, %v1118
          %v1120 = vpop.f32.mrb[0].mxu0
          %1121 = vdwg.mxu0
          %v1122 = vld [vmem:[#allocation2] sm:$0xff]
          %v1123 = vld [vmem:[#allocation2 + $0x8] sm:$0xff]
          %v1124 = vld [vmem:[#allocation2 + $0x10] sm:$0xff]
          %v1125 = vld [vmem:[#allocation2 + $0x18] sm:$0xff]
          %v1126 = vld [vmem:[#allocation2 + $0x20] sm:$0xff]
          %v1127 = vld [vmem:[#allocation2 + $0x28] sm:$0xff]
          %v1128 = vld [vmem:[#allocation2 + $0x30] sm:$0xff]
          %v1129 = vld [vmem:[#allocation2 + $0x38] sm:$0xff]
          %v1130 = vld [vmem:[#allocation2 + $0x40] sm:$0xff]
          %v1131 = vld [vmem:[#allocation2 + $0x48] sm:$0xff]
          %v1132 = vld [vmem:[#allocation2 + $0x50] sm:$0xff]
          %v1133 = vld [vmem:[#allocation2 + $0x58] sm:$0xff]
          %v1134 = vld [vmem:[#allocation2 + $0x60] sm:$0xff]
          %v1135 = vld [vmem:[#allocation2 + $0x68] sm:$0xff]
          %v1136 = vld [vmem:[#allocation2 + $0x70] sm:$0xff]
          %v1137 = vld [vmem:[#allocation2 + $0x78] sm:$0xff]
          %v1138 = vadd.f32 %v1122, %v1060
          %v1139 = vadd.f32 %v1123, %v1063
          %v1140 = vadd.f32 %v1124, %v1068
          %v1141 = vadd.f32 %v1125, %v1071
          %v1142 = vadd.f32 %v1126, %v1076
          %v1143 = vadd.f32 %v1127, %v1079
          %v1144 = vadd.f32 %v1128, %v1084
          %v1145 = vadd.f32 %v1129, %v1087
          %v1146 = vadd.f32 %v1130, %v1092
          %v1147 = vadd.f32 %v1131, %v1095
          %v1148 = vadd.f32 %v1132, %v1100
          %v1149 = vadd.f32 %v1133, %v1103
          %v1150 = vadd.f32 %v1134, %v1108
          %v1151 = vadd.f32 %v1135, %v1111
          %v1152 = vadd.f32 %v1136, %v1116
          %v1153 = vadd.f32 %v1137, %v1119
          %v1154 = vld [vmem:[%s5] sm:$0x1]
          %v1156 = vlaneseq
          %v1157 = vshrl.u32 %v1156, 7
          %v1158 = vsub.s32 0, %v1157
          %v1159 = vrot.slane %v1154, %v1158
          %v1161 = vadd.f32 %v1138, %v1159
          %v1162 = vadd.f32 %v1139, %v1159
          %v1163 = vadd.f32 %v1140, %v1159
          %v1164 = vadd.f32 %v1141, %v1159
          %v1165 = vadd.f32 %v1142, %v1159
          %v1166 = vadd.f32 %v1143, %v1159
          %v1167 = vadd.f32 %v1144, %v1159
          %v1168 = vadd.f32 %v1145, %v1159
          %v1169 = vadd.f32 %v1146, %v1159
          %v1170 = vadd.f32 %v1147, %v1159
          %v1171 = vadd.f32 %v1148, %v1159
          %v1172 = vadd.f32 %v1149, %v1159
          %v1173 = vadd.f32 %v1150, %v1159
          %v1174 = vadd.f32 %v1151, %v1159
          %v1175 = vadd.f32 %v1152, %v1159
          %v1176 = vadd.f32 %v1153, %v1159
          %1177 = vst [vmem:[%s418] sm:$0xff] %v1161
          %1178 = vst [vmem:[%s418 + $0x8] sm:$0xff] %v1162
          %1179 = vst [vmem:[%s418 + $0x10] sm:$0xff] %v1163
          %1180 = vst [vmem:[%s418 + $0x18] sm:$0xff] %v1164
          %1181 = vst [vmem:[%s418 + $0x20] sm:$0xff] %v1165
          %1182 = vst [vmem:[%s418 + $0x28] sm:$0xff] %v1166
          %1183 = vst [vmem:[%s418 + $0x30] sm:$0xff] %v1167
          %1184 = vst [vmem:[%s418 + $0x38] sm:$0xff] %v1168
          %1185 = vst [vmem:[%s418 + $0x40] sm:$0xff] %v1169
          %1186 = vst [vmem:[%s418 + $0x48] sm:$0xff] %v1170
          %1187 = vst [vmem:[%s418 + $0x50] sm:$0xff] %v1171
          %1188 = vst [vmem:[%s418 + $0x58] sm:$0xff] %v1172
          %1189 = vst [vmem:[%s418 + $0x60] sm:$0xff] %v1173
          %1190 = vst [vmem:[%s418 + $0x68] sm:$0xff] %v1174
          %1191 = vst [vmem:[%s418 + $0x70] sm:$0xff] %v1175
          %1192 = vst [vmem:[%s418 + $0x78] sm:$0xff] %v1176
        $region76: #{tpu_custom_call.1} parent=47 // pred_fallthru
          _
        %s1193 = sand.u32 %s212, 1
        %s1194 = scalar_lea.sflag [#allocation5], %s1193
        %s1195 = sand.u32 %s212, 1
        %s1196 = smul.addr %s1195, 128
        %s1197 = scalar_lea.vmem [#allocation12], %s1196
        // Predicated region
        $region77: #{tpu_custom_call.1} parent=47 // pred_check
          %p1198 = pneg %p222
        $region78: #{tpu_custom_call.1} parent=47 // pred_check_branch
          %1200 = sbr.rel (%p1198) target = $region80
        $region79: #{tpu_custom_call.1} parent=47 // pred_region
          %s1201 = smul.u32 16, %s32
          %s1203 = ssub.s32 2048, 2048
          %1204 = vsyncadd %s1194, %s1203
          %s1205 = smul.addr %s1201, 128
          %s1206 = scalar_lea.hbm %s7, %s1205
          %s1207 = sshll.u32 %s1197, 4
          %s1208 = int_to_ptr.vmem [resolvable:$true] %s1207
          %1213 = dma.vmem_to_hbm [thread:$0]  %s1208, 2048, %s1206, %s1194, 128, 128, 8
        $region80: #{tpu_custom_call.1} parent=47 // pred_fallthru
          _
      $region48: #{tpu_custom_call.1} parent=5 // pred_fallthru
        _
      %p1214 = scmp.le.s32.totalorder 2, %s23
      // Predicated region
      $region81: #{tpu_custom_call.1} parent=5 // pred_check
        %p1215 = pneg %p1214
      $region82: #{tpu_custom_call.1} parent=5 // pred_check_branch
        %1217 = sbr.rel (%p1215) target = $region84
      $region83: #{tpu_custom_call.1} parent=5 // pred_region
        %s1218 = ssub.s32 %s23, 2
        // Predicated region
        $region85: #{tpu_custom_call.1} parent=83 // pred_check
          %p1219 = pneg %p228
        $region86: #{tpu_custom_call.1} parent=83 // pred_check_branch
          %1221 = sbr.rel (%p1219) target = $region88
        $region87: #{tpu_custom_call.1} parent=83 // pred_region
          %s1222 = sand.u32 %s213, 1
          %s1223 = scalar_lea.sflag [#allocation5], %s1222
          %s1224 = sand.u32 %s213, 1
          %s1225 = smul.addr %s1224, 128
          %s1226 = scalar_lea.vmem [#allocation12], %s1225
          %1227 = dma.done %s1223, 2048
        $region88: #{tpu_custom_call.1} parent=83 // pred_fallthru
          _
      $region84: #{tpu_custom_call.1} parent=5 // pred_fallthru
        _
    $region6: #{tpu_custom_call.1} parent=1 // loop_footer
      %s27 = sadd.s32 1, %s23
    $region7: #{tpu_custom_call.1} parent=1 // loop_footer_branch
      %22 = sbr.rel target = $region3
    $region8: #{tpu_custom_call.1} parent=1 // loop_exit
      _
    %1228 = vsyncpa [#allocation4], 1
    %s1229 = scalar_lea.sflag [#allocation4], 1
    %1230 = vsyncpa %s1229, 1
    %1231 = vsyncpa [#allocation7], 1
    %s1232 = scalar_lea.sflag [#allocation7], 1
    %1233 = vsyncpa %s1232, 1
    %1234 = vsyncpa [#allocation10], 1
    %1235 = vsyncpa [#allocation5], 1
    %s1236 = scalar_lea.sflag [#allocation5], 1
    %1237 = vsyncpa %s1236, 1

</llo_original>
